<compile_context>
chip_gen: v5e
topology: v5e:2x2
jax: 0.10.0
libtpu: 0.0.40
codegen_flags: <defaults>
</compile_context>

<pallas_src>
import jax
import jax.numpy as jnp
from jax.experimental import pallas as pl
from jax.experimental.pallas import tpu as pltpu
import math

_VMEM_LIMIT = 32 * 1024 * 1024  # explicit, with headroom on v7x (64 MiB physical)


def _round_up(x, m):
    return (x + m - 1) // m * m


def _cdiv(a, b):
    return -(-a // b)


# --------------------------------------------------------------------------
# Kernel 1: collapsed RC_Module(1, nf, 4, mlp_field=5) + outer tanh, channel-major.
#   RC has no nonlinearity between Linear(1,nf) and Linear(nf,4), so
#     mean_p(out_p) = W_rc @ x + b_rc
#   followed by: tanh ; round(*127) ; clamp(+127,0,255)/255 ; tanh
#   (the reference's second round is a no-op: its input is already integer-valued)
#
#   xT_ref : [25, tn] f32   (mlp-field positions on sublanes, samples on lanes)
#   wT_ref : [4, 25]  f32   collapsed RC weight (out, in)
#   b_ref  : [4, 1]   f32
#   o_ref  : [4, tn]  f32   lane-dense output slab
# --------------------------------------------------------------------------
def _rc_kernel(xT_ref, wT_ref, b_ref, o_ref):
    out = jnp.dot(wT_ref[...], xT_ref[...],
                  preferred_element_type=jnp.float32) + b_ref[...]
    out = jnp.tanh(out)
    out = jnp.round(out * 127.0)                                 # round_func
    out = jnp.clip(out + 127.0, 0.0, 255.0) * (1.0 / 255.0)      # 2nd round dropped
    o_ref[...] = jnp.tanh(out)                                   # outer tanh in MuLUTUnit


# --------------------------------------------------------------------------
# Kernel 2: relu(conv_naive 2x2) + DenseConv x4 + conv6 + tanh, K-concatenated.
#   p_ref  : [4, tm]       bf16  (TL, TR, BL, BR rows; pixels on lanes)
#   wn_ref : [nf, 4]       bf16  conv_naive weight (out, in)
#   w2_ref : [nf, nf]      bf16
#   w3_ref : [nf, 2nf]     bf16
#   w4_ref : [nf, 3nf]     bf16
#   w5_ref : [nf, 4nf]     bf16
#   w6_ref : [1, 5nf]      bf16
#   b_ref  : [5, nf, 1]    f32   (bn, b2..b5) broadcastable columns
#   b6_ref : [1, 1]        f32
#   o_ref  : [1, tm]       f32   lane-dense output slab
#   slab   : [5nf, tm]     bf16  VMEM scratch: running dense-concat activations
# --------------------------------------------------------------------------
def _mlp_kernel(p_ref, wn_ref, w2_ref, w3_ref, w4_ref, w5_ref, w6_ref,
                b_ref, b6_ref, o_ref, slab_ref):
    def dot(a, b):
        return jnp.dot(a, b, preferred_element_type=jnp.float32)

    relu = lambda v: jnp.maximum(v, 0.0)
    bf16 = jnp.bfloat16
    nf = wn_ref.shape[0]

    x0 = relu(dot(wn_ref[...], p_ref[...]) + b_ref[0])           # conv_naive + ReLU
    slab_ref[pl.ds(0, nf), :] = x0.astype(bf16)
    f2 = relu(dot(w2_ref[...], slab_ref[pl.ds(0, nf), :]) + b_ref[1])
    slab_ref[pl.ds(nf, nf), :] = f2.astype(bf16)
    f3 = relu(dot(w3_ref[...], slab_ref[pl.ds(0, 2 * nf), :]) + b_ref[2])
    slab_ref[pl.ds(2 * nf, nf), :] = f3.astype(bf16)
    f4 = relu(dot(w4_ref[...], slab_ref[pl.ds(0, 3 * nf), :]) + b_ref[3])
    slab_ref[pl.ds(3 * nf, nf), :] = f4.astype(bf16)
    f5 = relu(dot(w5_ref[...], slab_ref[pl.ds(0, 4 * nf), :]) + b_ref[4])
    slab_ref[pl.ds(4 * nf, nf), :] = f5.astype(bf16)
    y = dot(w6_ref[...], slab_ref[...]) + b6_ref[...]            # conv6 over full concat
    o_ref[...] = jnp.tanh(y)                                     # [1, tm] f32


# --------------------------------------------------------------------------
# Parameter construction (deterministic, in-script) -- torch-native layouts.
# --------------------------------------------------------------------------
def init_params(key, nf, mlp_field=5, out_dim=4):
    P2 = mlp_field * mlp_field
    ks = jax.random.split(key, 10)
    nrm = lambda k, shape, s: jax.random.normal(k, shape, jnp.float32) * s
    return dict(
        # RC_Module: 25x Linear(1, nf) and 25x Linear(nf, 4)
        rc_w1=nrm(ks[0], (P2, nf), 1.0),
        rc_b1=nrm(ks[1], (P2, nf), 0.1),
        rc_w2=nrm(ks[2], (P2, nf, out_dim), 1.0 / math.sqrt(nf)),
        rc_b2=nrm(ks[3], (P2, out_dim), 0.1),
        # conv_naive: Conv(1, nf, 2) -- weight [nf, 1*2*2], bias init 0
        wn=nrm(ks[4], (nf, 4), math.sqrt(2.0 / 4.0)),
        bn=jnp.zeros((nf,), jnp.float32),
        # DenseConv 1x1 convs ([out, in] layout, bias init 0)
        w2=nrm(ks[5], (nf, nf), math.sqrt(2.0 / nf)),
        b2=jnp.zeros((nf,), jnp.float32),
        w3=nrm(ks[6], (nf, 2 * nf), math.sqrt(2.0 / (2 * nf))),
        b3=jnp.zeros((nf,), jnp.float32),
        w4=nrm(ks[7], (nf, 3 * nf), math.sqrt(2.0 / (3 * nf))),
        b4=jnp.zeros((nf,), jnp.float32),
        w5=nrm(ks[8], (nf, 4 * nf), math.sqrt(2.0 / (4 * nf))),
        b5=jnp.zeros((nf,), jnp.float32),
        # conv6: Conv(5*nf, upscale*upscale=1, 1)
        w6=nrm(ks[9], (1, 5 * nf), math.sqrt(2.0 / (5 * nf))),
        b6=jnp.zeros((), jnp.float32),
    )


def prepare_params(raw, *, nf, mlp_field=5, out_dim=4):
    """Collapse the RC module and pack weights for the kernels (torch DenseConv
    concatenation order is [x0, f2, f3, f4, f5], matching the slab bands)."""
    P2 = mlp_field * mlp_field
    # --- RC collapse (exact: the two Linears compose affinely, mean is linear) ---
    w_rc = jnp.einsum('pf,pfo->po', raw['rc_w1'], raw['rc_w2']) / P2           # [25, 4]
    b_rc = (jnp.einsum('pf,pfo->o', raw['rc_b1'], raw['rc_w2'])
            + raw['rc_b2'].sum(axis=0)) / P2                                    # [4]
    b_stack = jnp.stack([raw['bn'], raw['b2'], raw['b3'], raw['b4'], raw['b5']],
                        axis=0).reshape(5, nf, 1).astype(jnp.float32)           # [5, nf, 1]
    return dict(
        w_rcT=w_rc.T.astype(jnp.float32),                 # [4, 25] channel-major
        b_rcT=b_rc.reshape(out_dim, 1).astype(jnp.float32),
        wn=raw['wn'].astype(jnp.bfloat16),                # [nf, 4]
        w2=raw['w2'].astype(jnp.bfloat16),                # [nf, nf]
        w3=raw['w3'].astype(jnp.bfloat16),                # [nf, 2nf]
        w4=raw['w4'].astype(jnp.bfloat16),                # [nf, 3nf]
        w5=raw['w5'].astype(jnp.bfloat16),                # [nf, 4nf]
        w6=raw['w6'].astype(jnp.bfloat16),                # [1, 5nf]
        b_stack=b_stack,
        b6=raw['b6'].reshape(1, 1).astype(jnp.float32),
    )


# --------------------------------------------------------------------------
# Wrapper reproducing MuLUTUnit.forward for mode='2x2', stage=1, dense=True.
# --------------------------------------------------------------------------
def mulut_unit_forward(x, r_H, r_W, x_dense, x_3x3, x_7x7, params, *, nf):
    del r_H, r_W, x_3x3, x_7x7                  # unused for mode '2x2' (as in torch)
    B, C, H, W = x_dense.shape
    N, P, _, _ = x.shape                        # [N, 5, 5, 1]
    P2 = P * P
    out_dim = 4
    assert N * out_dim == B * C * H * W, "RC output must tile the dense image"
    assert params["wn"].shape == (nf, 4)

    # ---- Pallas kernel 1: collapsed RC_Module + tanh -> lane-dense [4, N] ----
    xT = x.reshape(N, P2).astype(jnp.float32).T          # [25, N] channel-major
    tn = min(8192, _round_up(N, 128))
    Np = _round_up(N, tn)
    if Np // tn < 2 and N > 128:                         # keep >=2 steps (v7x dual TC)
        tn = _round_up(_cdiv(N, 2), 128)
        Np = _round_up(N, tn)
    if Np != N:
        xT = jnp.pad(xT, ((0, 0), (0, Np - N)))
    rc_cm = pl.pallas_call(
        _rc_kernel,
        grid=(Np // tn,),
        in_specs=[
            pl.BlockSpec((P2, tn), lambda i: (0, i)),
            pl.BlockSpec((out_dim, P2), lambda i: (0, 0)),
            pl.BlockSpec((out_dim, 1), lambda i: (0, 0)),
        ],
        out_specs=pl.BlockSpec((out_dim, tn), lambda i: (0, i)),
        out_shape=jax.ShapeDtypeStruct((out_dim, Np), jnp.float32),
        compiler_params=pltpu.CompilerParams(
            dimension_semantics=("parallel",),
            vmem_limit_bytes=_VMEM_LIMIT),
    )(xT, params["w_rcT"], params["b_rcT"])
    rc = rc_cm[:, :N].T                                  # [N, 4] (cheap XLA transpose)

    # ---- glue: reshape -> replicate pad -> 4 shifted 2x2 views (channel-major) ----
    BC = B * C
    xi = rc.reshape(BC, H, W)
    xi = jnp.pad(xi, ((0, 0), (0, 1), (0, 1)), mode="edge")       # F.pad replicate
    views = jnp.stack(
        [xi[:, 0:H, 0:W], xi[:, 0:H, 1:W + 1],
         xi[:, 1:H + 1, 0:W], xi[:, 1:H + 1, 1:W + 1]], axis=0)   # F.unfold(x, 2) order
    M = BC * H * W
    patches = views.reshape(4, M).astype(jnp.bfloat16)            # [4, M]

    # ---- Pallas kernel 2: conv_naive + dense chain (K-concat slab) + conv6 + tanh ----
    tm = min(8192, _round_up(M, 128))
    Mp = _round_up(M, tm)
    if Mp // tm < 2 and M > 128:                         # keep >=2 steps (v7x dual TC)
        tm = _round_up(_cdiv(M, 2), 128)
        Mp = _round_up(M, tm)
    if Mp != M:
        patches = jnp.pad(patches, ((0, 0), (0, Mp - M)))
    y = pl.pallas_call(
        _mlp_kernel,
        grid=(Mp // tm,),
        in_specs=[
            pl.BlockSpec((4, tm), lambda i: (0, i)),
            pl.BlockSpec((nf, 4), lambda i: (0, 0)),
            pl.BlockSpec((nf, nf), lambda i: (0, 0)),
            pl.BlockSpec((nf, 2 * nf), lambda i: (0, 0)),
            pl.BlockSpec((nf, 3 * nf), lambda i: (0, 0)),
            pl.BlockSpec((nf, 4 * nf), lambda i: (0, 0)),
            pl.BlockSpec((1, 5 * nf), lambda i: (0, 0)),
            pl.BlockSpec((5, nf, 1), lambda i: (0, 0, 0)),
            pl.BlockSpec((1, 1), lambda i: (0, 0)),
        ],
        out_specs=pl.BlockSpec((1, tm), lambda i: (0, i)),
        out_shape=jax.ShapeDtypeStruct((1, Mp), jnp.float32),
        scratch_shapes=[pltpu.VMEM((5 * nf, tm), jnp.bfloat16)],
        compiler_params=pltpu.CompilerParams(
            dimension_semantics=("parallel",),
            vmem_limit_bytes=_VMEM_LIMIT),
    )(patches, params["wn"], params["w2"], params["w3"], params["w4"],
      params["w5"], params["w6"], params["b_stack"], params["b6"])

    # upscale == 1 -> no pixel shuffle; match torch output shape [M, 1, 1, 1]
    return y.reshape(Mp)[:M].reshape(M, 1, 1, 1)


if __name__ == "__main__":
    key = jax.random.PRNGKey(0)
    nf = 32
    B, C, H, W = 2, 2, 8, 8
    mlp_field = 5
    N = B * C * H * W // 4                      # one 2x2 output block per RC sample

    kx, kd, kp = jax.random.split(key, 3)
    x = jax.random.uniform(kx, (N, mlp_field, mlp_field, 1), jnp.float32)
    x_dense = jax.random.uniform(kd, (B, C, H, W), jnp.float32)
    r_H, r_W = H, W                                       # unused (mode '2x2')
    x_3x3 = jnp.zeros((N, 3, 3, 1), jnp.float32)          # unused (mode '2x2')
    x_7x7 = jnp.zeros((N, 7, 7, 1), jnp.float32)          # unused (mode '2x2')

    raw = init_params(kp, nf, mlp_field=mlp_field, out_dim=4)
    params = prepare_params(raw, nf=nf, mlp_field=mlp_field, out_dim=4)

    out = mulut_unit_forward(x, r_H, r_W, x_dense, x_3x3, x_7x7, params, nf=nf)
    out = jax.block_until_ready(out)
    assert out.shape == (B * C * H * W, 1, 1, 1)
    assert bool(jnp.all(jnp.isfinite(out)))
    print("KERNEL_OK")
</pallas_src>

<mosaic_0001>
module attributes {stable_mosaic.version = 11 : i64} {
  func.func @_rc_kernel(%arg0: i32, %arg1: memref<25x128xf32, #tpu.memory_space<vmem>>, %arg2: memref<4x25xf32, #tpu.memory_space<vmem>>, %arg3: memref<4x1xf32, #tpu.memory_space<vmem>>, %arg4: memref<4x128xf32, #tpu.memory_space<vmem>>) attributes {dimension_semantics = [#tpu.dimension_semantics<parallel>], iteration_bounds = array<i64: 1>, scalar_prefetch = 0 : i64, scratch_operands = 0 : i64, tpu.core_type = #tpu.core_type<tc>, window_params = [{transform_indices = @transform_0, window_bounds = array<i64: 25, 128>}, {pipeline_mode = #tpu.pipeline_mode<synchronous>, transform_indices = @transform_1, window_bounds = array<i64: 4, 25>}, {pipeline_mode = #tpu.pipeline_mode<synchronous>, transform_indices = @transform_2, window_bounds = array<i64: 4, 1>}, {transform_indices = @transform_3, window_bounds = array<i64: 4, 128>}]} {
    %c0 = arith.constant 0 : index
    %c0_0 = arith.constant 0 : index
    %0 = vector.load %arg2[%c0, %c0_0] : memref<4x25xf32, #tpu.memory_space<vmem>>, vector<4x25xf32>
    %c0_1 = arith.constant 0 : index
    %c0_2 = arith.constant 0 : index
    %1 = vector.load %arg1[%c0_1, %c0_2] : memref<25x128xf32, #tpu.memory_space<vmem>>, vector<25x128xf32>
    %cst = arith.constant dense<0.000000e+00> : vector<4x128xf32>
    %2 = tpu.matmul %0, %1, %cst {dimension_numbers = #tpu.dot_dimension_numbers<[1], [0], [0], [1], [0, 0, 1, 1], [], []>} : vector<4x25xf32>, vector<25x128xf32>, vector<4x128xf32> -> vector<4x128xf32>
    %c0_3 = arith.constant 0 : index
    %c0_4 = arith.constant 0 : index
    %3 = vector.load %arg3[%c0_3, %c0_4] : memref<4x1xf32, #tpu.memory_space<vmem>>, vector<4x1xf32>
    %4 = vector.broadcast %3 : vector<4x1xf32> to vector<4x128xf32>
    %5 = arith.addf %2, %4 : vector<4x128xf32>
    %6 = math.tanh %5 : vector<4x128xf32>
    %cst_5 = arith.constant 1.270000e+02 : f32
    %7 = vector.broadcast %cst_5 : f32 to vector<4x128xf32>
    %8 = arith.mulf %6, %7 : vector<4x128xf32>
    %9 = math.roundeven %8 : vector<4x128xf32>
    %cst_6 = arith.constant 1.270000e+02 : f32
    %10 = vector.broadcast %cst_6 : f32 to vector<4x128xf32>
    %11 = arith.addf %9, %10 : vector<4x128xf32>
    %cst_7 = arith.constant 0.000000e+00 : f32
    %cst_8 = arith.constant 2.550000e+02 : f32
    %12 = vector.broadcast %cst_7 : f32 to vector<4x128xf32>
    %13 = arith.maximumf %12, %11 : vector<4x128xf32>
    %14 = vector.broadcast %cst_8 : f32 to vector<4x128xf32>
    %15 = arith.minimumf %14, %13 : vector<4x128xf32>
    %cst_9 = arith.constant 0.00392156886 : f32
    %16 = vector.broadcast %cst_9 : f32 to vector<4x128xf32>
    %17 = arith.mulf %15, %16 : vector<4x128xf32>
    %18 = math.tanh %17 : vector<4x128xf32>
    %c0_10 = arith.constant 0 : index
    %c0_11 = arith.constant 0 : index
    %19 = vector.load %arg4[%c0_10, %c0_11] : memref<4x128xf32, #tpu.memory_space<vmem>>, vector<4x128xf32>
    tpu.vector_store %arg4[%c0_10, %c0_11], %18 {strides = array<i32>} : memref<4x128xf32, #tpu.memory_space<vmem>>, vector<4x128xf32>,
    return
  }
  func.func @transform_0(%arg0: i32) -> (i32, i32) {
    %c0_i32 = arith.constant 0 : i32
    %c0_i32_0 = arith.constant 0 : i32
    return %c0_i32, %arg0 : i32, i32
  }
  func.func @transform_1(%arg0: i32) -> (i32, i32) {
    %c0_i32 = arith.constant 0 : i32
    %c0_i32_0 = arith.constant 0 : i32
    %c0_i32_1 = arith.constant 0 : i32
    return %c0_i32, %c0_i32_0 : i32, i32
  }
  func.func @transform_2(%arg0: i32) -> (i32, i32) {
    %c0_i32 = arith.constant 0 : i32
    %c0_i32_0 = arith.constant 0 : i32
    %c0_i32_1 = arith.constant 0 : i32
    return %c0_i32, %c0_i32_0 : i32, i32
  }
  func.func @transform_3(%arg0: i32) -> (i32, i32) {
    %c0_i32 = arith.constant 0 : i32
    %c0_i32_0 = arith.constant 0 : i32
    return %c0_i32, %arg0 : i32, i32
  }
}

</mosaic_0001>

<llo_original>
// kernel: tpu_custom_call.1
$region0: #{tpu_custom_call.1}
  #allocation0 [shape = 'u32[]', space=smem, size = 0x4, offset = 0x4, fixed_abs, tag = 'smem constant byte address 0x4 - core index']
  #allocation1 [shape = 'u32[72,128]{1,0:T(1,128)}', space=vmem, size = 0x9000, scoped, tag = 'internal scratch']
  %s0 = inlined_call_operand.hbm [shape: f32[25,128], index: 0, kind: input, shape index: {}]
  %s1 = inlined_call_operand.vmem [shape: f32[4,25], index: 1, kind: input, shape index: {}]
  %s2 = inlined_call_operand.vmem [shape: f32[4,1], index: 2, kind: input, shape index: {}]
  %s3 = inlined_call_operand.hbm [shape: f32[4,128], index: 3, kind: output, shape index: {}]
  %s4 = sld [smem:[#allocation0]]
  $region26: #{tpu_custom_call.1} parent=0
    _
  %s6 = ssub.s32 1, %s4
  %s7 = scalar_select 0, %s6, %s4
  $region1: #{tpu_custom_call.1} parent=0
    #allocation2 [shape = 'u8[16384]{0}', space=vmem, size = 0x4000, scoped, tag = 'input window, operand 0, single buffered']
    #allocation3 [shape = 's32[1]{0}', space=sflag, size = 0x4, scoped, tag = 'scoped memory for tpu_custom_call.1']
    #allocation4 [shape = 's32[1]{0}', space=sflag, size = 0x4, scoped, tag = 'scoped memory for tpu_custom_call.1']
    #allocation5 [shape = 'u8[2048]{0}', space=vmem, size = 0x800, scoped, tag = 'output window, operand 0, single buffered']
    %8 = vsyncpa [#allocation3], 0
    %9 = vsyncpa [#allocation4], 0
    // Predicated region
    $region2: #{tpu_custom_call.1} parent=1 // pred_check
      _
    $region3: #{tpu_custom_call.1} parent=1 // pred_check_branch
      %11 = sbr.rel (0) target = $region5
    $region4: #{tpu_custom_call.1} parent=1 // pred_region
      %13 = vsyncadd [#allocation3], 0
      %s14 = sshll.u32 %s0, 4
      %s15 = int_to_ptr.hbm [resolvable:$true] %s14
      %s16 = sshll.u32 [#allocation2], 4
      %s17 = int_to_ptr.vmem [resolvable:$true] %s16
      %22 = dma.hbm_to_vmem [thread:$0]  %s15, 512, %s17, [#allocation3], 128, 128, 8
    $region5: #{tpu_custom_call.1} parent=1 // pred_fallthru
      _
    // Predicated region
    $region6: #{tpu_custom_call.1} parent=1 // pred_check
      _
    $region7: #{tpu_custom_call.1} parent=1 // pred_check_branch
      %24 = sbr.rel (0) target = $region9
    $region8: #{tpu_custom_call.1} parent=1 // pred_region
      _
    $region9: #{tpu_custom_call.1} parent=1 // pred_fallthru
      _
    // Predicated region
    $region10: #{tpu_custom_call.1} parent=1 // pred_check
      _
    $region11: #{tpu_custom_call.1} parent=1 // pred_check_branch
      %26 = sbr.rel (0) target = $region13
    $region12: #{tpu_custom_call.1} parent=1 // pred_region
      _
    $region13: #{tpu_custom_call.1} parent=1 // pred_fallthru
      _
    // Predicated region
    $region14: #{tpu_custom_call.1} parent=1 // pred_check
      _
    $region15: #{tpu_custom_call.1} parent=1 // pred_check_branch
      %28 = sbr.rel (0) target = $region17
    $region16: #{tpu_custom_call.1} parent=1 // pred_region
      %30 = dma.done [#allocation3], 512
    $region17: #{tpu_custom_call.1} parent=1 // pred_fallthru
      _
    %v31 = vld [vmem:[%s1] sm:$0xf]
    %v32 = vld [vmem:[#allocation2] sm:$0xff]
    %v33 = vld [vmem:[#allocation2 + $0x8] sm:$0xff]
    %v34 = vld [vmem:[#allocation2 + $0x10] sm:$0xff]
    %v35 = vld [vmem:[#allocation2 + $0x18] sm:$0x1]
    %v36 = vld [vmem:[%s2] sm:$0xf]
    %38 = vset.pattern.permute.xlu0 0
    %39 = vperm.xlu0 %38, %v36
    %v40 = vpop.permute.xlu0 %39
    %vm42 = vcmask 203776
    %v44 = vsel %vm42, %v31, 0
    %vm46 = vcmask 1040384
    %v48 = vsel %vm46, %v35, 0
    %50 = vmatpush.msra.mxu0 0.0
    %51 = vmatpush.msra.mxu0 0.0
    %52 = vmatpush.msra.mxu0 0.0
    %53 = vmatpush.msra.mxu0 0.0
    %54 = vmatpush.msra.mxu0 0.0
    %55 = vmatpush.msra.mxu0 0.0
    %56 = vmatpush.msra.mxu0 0.0
    %57 = vmatpush.msra.mxu0 0.0
    %58 = vmatpush.msra.mxu0 0.0
    %59 = vmatpush.msra.mxu0 0.0
    %60 = vmatpush.msra.mxu0 0.0
    %61 = vmatpush.msra.mxu0 0.0
    %62 = vmatpush.msra.mxu0 %v48
    %63 = vmatpush.msra.mxu0 %v34
    %64 = vmatpush.msra.mxu0 %v33
    %65 = vmatpush.msra.mxu0 %v32
    %66 = vmatmul.f32.gmra.mxu0 %v44
    %v67 = vpop.f32.mrf.mxu0
    %v68 = vadd.f32 %v40, %v67
    %69 = vdwg.mxu0
    %v70 = vtanh.pop %v68
    %v71 = vmul.f32 %v70, 127.0
    %v72 = vround.ne.pseudo %v71
    %v73 = vadd.f32 %v72, 127.0
    %v74 = vmax.f32 %v73, 0.0
    %v75 = vmin.f32 %v74, 255.0
    %v76 = vmul.f32 %v75, 0.003921569
    %v77 = vtanh.pop %v76
    %78 = vst [vmem:[#allocation5] sm:$0xf] %v77
    // Predicated region
    $region18: #{tpu_custom_call.1} parent=1 // pred_check
      _
    $region19: #{tpu_custom_call.1} parent=1 // pred_check_branch
      %80 = sbr.rel (0) target = $region21
    $region20: #{tpu_custom_call.1} parent=1 // pred_region
      %82 = vsyncadd [#allocation4], 0
      %s84 = sshll.u32 [#allocation5], 4
      %s85 = int_to_ptr.vmem [resolvable:$true] %s84
      %s86 = sshll.u32 %s3, 4
      %s87 = int_to_ptr.hbm [resolvable:$true] %s86
      %89 = dma.vmem_to_hbm [thread:$0]  %s85, 64, %s87, [#allocation4]
    $region21: #{tpu_custom_call.1} parent=1 // pred_fallthru
      _
    // Predicated region
    $region22: #{tpu_custom_call.1} parent=1 // pred_check
      _
    $region23: #{tpu_custom_call.1} parent=1 // pred_check_branch
      %91 = sbr.rel (0) target = $region25
    $region24: #{tpu_custom_call.1} parent=1 // pred_region
      %93 = dma.done [#allocation4], 64
    $region25: #{tpu_custom_call.1} parent=1 // pred_fallthru
      _
    %94 = vsyncpa [#allocation3], 1
    %95 = vsyncpa [#allocation4], 1

</llo_original>
